<compile_context>
chip_gen: v5e
topology: v5e:2x2
jax: 0.10.0
libtpu: 0.0.40
codegen_flags: <defaults>
</compile_context>

<pallas_src>
import jax
import jax.numpy as jnp
from jax.experimental import pallas as pl
from jax.experimental.pallas import tpu as pltpu

BN_EPS = 1e-5


def _round_up(x, m):
    return ((x + m - 1) // m) * m


def _make_kernel(n_valid):
    """Two-pass kernel closure (n_valid is static)."""
    inv_n = 1.0 / float(n_valid)

    def kernel(x_ref, w1_ref, p_ref, o_ref,
               sum_ref, sumsq_ref, effw_ref, effb_ref):
        p = pl.program_id(0)   # 0 = statistics pass, 1 = output pass
        i = pl.program_id(1)   # batch-row tile index

        b1 = p_ref[0:1, :]                                        # (1, H)

        # ---- dis1: Linear + ReLU (bf16 inputs, f32 MXU accumulation) -----
        h = jnp.dot(x_ref[...], w1_ref[...],
                    preferred_element_type=jnp.float32)            # (T, H) f32
        h = jnp.maximum(h + b1, 0.0)

        @pl.when((p == 0) & (i == 0))
        def _():
            sum_ref[...] = jnp.zeros_like(sum_ref)
            sumsq_ref[...] = jnp.zeros_like(sumsq_ref)

        # ---- pass 0: shifted per-feature sum / sum-of-squares ------------
        @pl.when(p == 0)
        def _():
            # c = ReLU(b1): padded rows (x == 0) have h == c exactly, so they
            # contribute 0 to both sums -> no validity mask needed.
            c = jnp.maximum(b1, 0.0)
            hd = h - c
            sum_ref[...] += jnp.sum(hd, axis=0, keepdims=True)
            sumsq_ref[...] += jnp.sum(hd * hd, axis=0, keepdims=True)

        # ---- pass 1, first tile: fold BN + dis2 into scale / bias --------
        @pl.when((p == 1) & (i == 0))
        def _():
            gamma = p_ref[1:2, :]
            beta = p_ref[2:3, :]
            w2 = p_ref[3:4, :]
            b2 = p_ref[4:5, 0:1]                                  # (1, 1)
            c = jnp.maximum(b1, 0.0)
            m_shift = sum_ref[...] * inv_n                        # E[h] - c
            mean = c + m_shift
            var = jnp.maximum(sumsq_ref[...] * inv_n - m_shift * m_shift, 0.0)
            scale = gamma * jax.lax.rsqrt(var + BN_EPS)           # (1, H)
            effw_ref[...] = scale * w2
            effb_ref[...] = b2 + jnp.sum((beta - scale * mean) * w2,
                                         axis=1, keepdims=True)   # (1, 1)

        # ---- pass 1: logits = <h, eff_w> + eff_b ; sigmoid ---------------
        @pl.when(p == 1)
        def _():
            logits = jnp.sum(h * effw_ref[...], axis=-1, keepdims=True)  # (T,1)
            o_ref[...] = jax.nn.sigmoid(logits + effb_ref[...])

    return kernel


def discriminator_forward(x, params, *, block_rows=512):
    """x: (N, input_dim) float32 -> (N,) float32 probabilities."""
    n, d = x.shape
    w1, b1, gamma, beta, w2, b2 = params
    h_dim = w1.shape[1]

    # Row tile: multiple of 16 (bf16 sublane packing), capped by the batch.
    tile = min(_round_up(block_rows, 16), _round_up(n, 16))
    n_pad = _round_up(n, tile)
    if n_pad != n:
        x = jnp.pad(x, ((0, n_pad - n), (0, 0)))
    nt = n_pad // tile

    # bf16 inputs for the dominant GEMM (f32 accumulation inside the kernel).
    x_bf = x.astype(jnp.bfloat16)
    w1_bf = w1.astype(jnp.bfloat16)

    # Stack the small per-feature params into a single (8, H) block.
    pstack = jnp.zeros((8, h_dim), jnp.float32)
    pstack = pstack.at[0, :].set(b1)
    pstack = pstack.at[1, :].set(gamma)
    pstack = pstack.at[2, :].set(beta)
    pstack = pstack.at[3, :].set(w2)
    pstack = pstack.at[4, 0].set(b2)

    kernel = _make_kernel(n_valid=n)

    out = pl.pallas_call(
        kernel,
        out_shape=jax.ShapeDtypeStruct((n_pad, 1), jnp.float32),
        grid_spec=pltpu.PrefetchScalarGridSpec(
            num_scalar_prefetch=0,
            grid=(2, nt),                                   # (pass, row tile)
            in_specs=[
                pl.BlockSpec((tile, d), lambda p, i: (i, 0)),    # x (bf16)
                pl.BlockSpec((d, h_dim), lambda p, i: (0, 0)),   # w1 (bf16)
                pl.BlockSpec((8, h_dim), lambda p, i: (0, 0)),   # stacked params
            ],
            # Pass 0 never writes the output: index i*p keeps block 0 resident
            # for the whole stats pass (no pass-0 zero-fill / HBM writeback);
            # each output block is written exactly once, in pass 1.
            out_specs=pl.BlockSpec((tile, 1), lambda p, i: (i * p, 0)),
            scratch_shapes=[
                pltpu.VMEM((1, h_dim), jnp.float32),   # sum(h - relu(b1))
                pltpu.VMEM((1, h_dim), jnp.float32),   # sum((h - relu(b1))^2)
                pltpu.VMEM((1, h_dim), jnp.float32),   # folded eff_w
                pltpu.VMEM((1, 1), jnp.float32),       # folded eff_b
            ],
        ),
        compiler_params=pltpu.CompilerParams(
            # Both axes are sequential: pass 1 depends on pass-0 scratch, and
            # pass 0 reduces across row tiles into shared scratch.
            # TODO(synk): on v7x (2 TensorCores) a split into two pallas_calls
            # with a 'parallel' row axis would shard the GEMM across cores.
            dimension_semantics=("arbitrary", "arbitrary"),
            vmem_limit_bytes=48 * 1024 * 1024,
        ),
        cost_estimate=pl.CostEstimate(
            flops=2 * 2 * n_pad * d * h_dim,                 # GEMM, two passes
            transcendentals=n_pad + h_dim,                   # sigmoid + rsqrt
            bytes_accessed=2 * n_pad * d * 2 + d * h_dim * 2
                           + 8 * h_dim * 4 + n_pad * 4,
        ),
    )(x_bf, w1_bf, pstack)

    # torch's x.view(len(x)); drop batch padding.
    return out[:n, 0]


def init_params(key, input_dim, hidden_dim):
    """Synthetic init matching the nn.Module's parameter shapes (w1 pre-transposed)."""
    k1, k2, k3, k4 = jax.random.split(key, 4)
    w1 = jax.random.normal(k1, (input_dim, hidden_dim), jnp.float32) * 0.1
    b1 = jax.random.normal(k2, (hidden_dim,), jnp.float32) * 0.1
    gamma = jnp.ones((hidden_dim,), jnp.float32)    # BatchNorm1d default affine
    beta = jnp.zeros((hidden_dim,), jnp.float32)
    w2 = jax.random.normal(k3, (hidden_dim,), jnp.float32) * 0.1
    b2 = jax.random.normal(k4, (), jnp.float32) * 0.1
    return (w1, b1, gamma, beta, w2, b2)


def _reference(x, params, *, matmul_dtype=jnp.float32):
    """Pure-JAX reference (training-mode BN, biased batch variance)."""
    w1, b1, gamma, beta, w2, b2 = params
    h = jnp.dot(x.astype(matmul_dtype), w1.astype(matmul_dtype),
                preferred_element_type=jnp.float32)
    h = jnp.maximum(h + b1[None, :], 0.0)
    mean = jnp.mean(h, axis=0)
    var = jnp.mean((h - mean) ** 2, axis=0)
    h_bn = (h - mean) * jax.lax.rsqrt(var + BN_EPS) * gamma + beta
    logits = jnp.dot(h_bn, w2) + b2
    return jax.nn.sigmoid(logits)


if __name__ == "__main__":
    input_dim, hidden_dim = 32, 32
    key = jax.random.PRNGKey(0)
    kx1, kx2, kp = jax.random.split(key, 3)
    params = init_params(kp, input_dim, hidden_dim)

    # Case 1: tiny batch, single row tile (batch padded 8 -> 16); padded rows
    # must not perturb the BN statistics.
    x1 = jax.random.normal(kx1, (8, input_dim), jnp.float32)
    out1 = jax.block_until_ready(discriminator_forward(x1, params))
    ref1_bf = _reference(x1, params, matmul_dtype=jnp.bfloat16)
    ref1_f32 = _reference(x1, params, matmul_dtype=jnp.float32)
    assert out1.shape == (8,), out1.shape
    assert jnp.allclose(out1, ref1_bf, atol=5e-4, rtol=1e-3), (out1, ref1_bf)
    assert jnp.allclose(out1, ref1_f32, atol=5e-2, rtol=5e-2), (out1, ref1_f32)

    # Case 2: batch not a multiple of the tile -> exercises multi-tile two-pass
    # BN accumulation (grid = (2, 3)) plus padding in the last tile.
    x2 = jax.random.normal(kx2, (40, input_dim), jnp.float32)
    out2 = jax.block_until_ready(discriminator_forward(x2, params, block_rows=16))
    ref2_bf = _reference(x2, params, matmul_dtype=jnp.bfloat16)
    assert out2.shape == (40,), out2.shape
    assert jnp.allclose(out2, ref2_bf, atol=5e-4, rtol=1e-3), (out2, ref2_bf)

    print("KERNEL_OK")
</pallas_src>

<mosaic_0001>
module attributes {stable_mosaic.version = 11 : i64} {
  func.func @kernel(%arg0: i32, %arg1: i32, %arg2: memref<16x32xbf16, #tpu.memory_space<vmem>>, %arg3: memref<32x32xbf16, #tpu.memory_space<vmem>>, %arg4: memref<8x32xf32, #tpu.memory_space<vmem>>, %arg5: memref<16x1xf32, #tpu.memory_space<vmem>>, %arg6: memref<1x32xf32, #tpu.memory_space<vmem>>, %arg7: memref<1x32xf32, #tpu.memory_space<vmem>>, %arg8: memref<1x32xf32, #tpu.memory_space<vmem>>, %arg9: memref<1x1xf32, #tpu.memory_space<vmem>>) attributes {dimension_semantics = [#tpu.dimension_semantics<arbitrary>, #tpu.dimension_semantics<arbitrary>], iteration_bounds = array<i64: 2, 1>, scalar_prefetch = 0 : i64, scratch_operands = 4 : i64, tpu.core_type = #tpu.core_type<tc>, window_params = [{transform_indices = @transform_0, window_bounds = array<i64: 16, 32>}, {pipeline_mode = #tpu.pipeline_mode<synchronous>, transform_indices = @transform_1, window_bounds = array<i64: 32, 32>}, {pipeline_mode = #tpu.pipeline_mode<synchronous>, transform_indices = @transform_2, window_bounds = array<i64: 8, 32>}, {transform_indices = @transform_3, window_bounds = array<i64: 16, 1>}]} {
    %c0 = arith.constant 0 : index
    %c0_0 = arith.constant 0 : index
    %0 = vector.load %arg4[%c0, %c0_0] : memref<8x32xf32, #tpu.memory_space<vmem>>, vector<1x32xf32>
    %c0_1 = arith.constant 0 : index
    %c0_2 = arith.constant 0 : index
    %1 = vector.load %arg2[%c0_1, %c0_2] : memref<16x32xbf16, #tpu.memory_space<vmem>>, vector<16x32xbf16>
    %c0_3 = arith.constant 0 : index
    %c0_4 = arith.constant 0 : index
    %2 = vector.load %arg3[%c0_3, %c0_4] : memref<32x32xbf16, #tpu.memory_space<vmem>>, vector<32x32xbf16>
    %cst = arith.constant dense<0.000000e+00> : vector<16x32xf32>
    %3 = tpu.matmul %1, %2, %cst {dimension_numbers = #tpu.dot_dimension_numbers<[1], [0], [0], [1], [0, 0, 1, 1], [], []>} : vector<16x32xbf16>, vector<32x32xbf16>, vector<16x32xf32> -> vector<16x32xf32>
    %4 = vector.broadcast %0 : vector<1x32xf32> to vector<16x32xf32>
    %5 = arith.addf %3, %4 : vector<16x32xf32>
    %cst_5 = arith.constant 0.000000e+00 : f32
    %6 = vector.broadcast %cst_5 : f32 to vector<16x32xf32>
    %7 = arith.maximumf %5, %6 : vector<16x32xf32>
    %c0_i32 = arith.constant 0 : i32
    %8 = arith.cmpi eq, %arg0, %c0_i32 : i32
    %c0_i32_6 = arith.constant 0 : i32
    %9 = arith.cmpi eq, %arg1, %c0_i32_6 : i32
    %10 = arith.andi %8, %9 : i1
    %11 = arith.extui %10 : i1 to i32
    %c0_i32_7 = arith.constant 0 : i32
    %12 = arith.cmpi ne, %11, %c0_i32_7 : i32
    scf.if %12 {
      %cst_14 = arith.constant 0.000000e+00 : f32
      %24 = vector.broadcast %cst_14 : f32 to vector<1x32xf32>
      %c0_15 = arith.constant 0 : index
      %c0_16 = arith.constant 0 : index
      %25 = vector.load %arg6[%c0_15, %c0_16] : memref<1x32xf32, #tpu.memory_space<vmem>>, vector<1x32xf32>
      tpu.vector_store %arg6[%c0_15, %c0_16], %24 {strides = array<i32>} : memref<1x32xf32, #tpu.memory_space<vmem>>, vector<1x32xf32>,
      %cst_17 = arith.constant 0.000000e+00 : f32
      %26 = vector.broadcast %cst_17 : f32 to vector<1x32xf32>
      %c0_18 = arith.constant 0 : index
      %c0_19 = arith.constant 0 : index
      %27 = vector.load %arg7[%c0_18, %c0_19] : memref<1x32xf32, #tpu.memory_space<vmem>>, vector<1x32xf32>
      tpu.vector_store %arg7[%c0_18, %c0_19], %26 {strides = array<i32>} : memref<1x32xf32, #tpu.memory_space<vmem>>, vector<1x32xf32>,
    } else {
    }
    %c0_i32_8 = arith.constant 0 : i32
    %13 = arith.cmpi eq, %arg0, %c0_i32_8 : i32
    %14 = arith.extui %13 : i1 to i32
    %c0_i32_9 = arith.constant 0 : i32
    %15 = arith.cmpi ne, %14, %c0_i32_9 : i32
    scf.if %15 {
      %cst_14 = arith.constant 0.000000e+00 : f32
      %24 = vector.broadcast %cst_14 : f32 to vector<1x32xf32>
      %25 = arith.maximumf %0, %24 : vector<1x32xf32>
      %26 = vector.broadcast %25 : vector<1x32xf32> to vector<16x32xf32>
      %27 = arith.subf %7, %26 : vector<16x32xf32>
      %c0_15 = arith.constant 0 : index
      %c0_16 = arith.constant 0 : index
      %28 = vector.load %arg6[%c0_15, %c0_16] : memref<1x32xf32, #tpu.memory_space<vmem>>, vector<1x32xf32>
      %cst_17 = arith.constant dense<0.000000e+00> : vector<32xf32>
      %29 = vector.multi_reduction <add>, %27, %cst_17 [0] : vector<16x32xf32> to vector<32xf32>
      %30 = vector.shape_cast %29 : vector<32xf32> to vector<1x32xf32>
      %31 = arith.addf %28, %30 : vector<1x32xf32>
      %c0_18 = arith.constant 0 : index
      %c0_19 = arith.constant 0 : index
      %32 = vector.load %arg6[%c0_18, %c0_19] : memref<1x32xf32, #tpu.memory_space<vmem>>, vector<1x32xf32>
      tpu.vector_store %arg6[%c0_18, %c0_19], %31 {strides = array<i32>} : memref<1x32xf32, #tpu.memory_space<vmem>>, vector<1x32xf32>,
      %c0_20 = arith.constant 0 : index
      %c0_21 = arith.constant 0 : index
      %33 = vector.load %arg7[%c0_20, %c0_21] : memref<1x32xf32, #tpu.memory_space<vmem>>, vector<1x32xf32>
      %34 = arith.mulf %27, %27 : vector<16x32xf32>
      %cst_22 = arith.constant dense<0.000000e+00> : vector<32xf32>
      %35 = vector.multi_reduction <add>, %34, %cst_22 [0] : vector<16x32xf32> to vector<32xf32>
      %36 = vector.shape_cast %35 : vector<32xf32> to vector<1x32xf32>
      %37 = arith.addf %33, %36 : vector<1x32xf32>
      %c0_23 = arith.constant 0 : index
      %c0_24 = arith.constant 0 : index
      %38 = vector.load %arg7[%c0_23, %c0_24] : memref<1x32xf32, #tpu.memory_space<vmem>>, vector<1x32xf32>
      tpu.vector_store %arg7[%c0_23, %c0_24], %37 {strides = array<i32>} : memref<1x32xf32, #tpu.memory_space<vmem>>, vector<1x32xf32>,
    } else {
    }
    %c1_i32 = arith.constant 1 : i32
    %16 = arith.cmpi eq, %arg0, %c1_i32 : i32
    %c0_i32_10 = arith.constant 0 : i32
    %17 = arith.cmpi eq, %arg1, %c0_i32_10 : i32
    %18 = arith.andi %16, %17 : i1
    %19 = arith.extui %18 : i1 to i32
    %c0_i32_11 = arith.constant 0 : i32
    %20 = arith.cmpi ne, %19, %c0_i32_11 : i32
    scf.if %20 {
      %c1 = arith.constant 1 : index
      %c0_14 = arith.constant 0 : index
      %24 = vector.load %arg4[%c1, %c0_14] : memref<8x32xf32, #tpu.memory_space<vmem>>, vector<1x32xf32>
      %c2 = arith.constant 2 : index
      %c0_15 = arith.constant 0 : index
      %25 = vector.load %arg4[%c2, %c0_15] : memref<8x32xf32, #tpu.memory_space<vmem>>, vector<1x32xf32>
      %c3 = arith.constant 3 : index
      %c0_16 = arith.constant 0 : index
      %26 = vector.load %arg4[%c3, %c0_16] : memref<8x32xf32, #tpu.memory_space<vmem>>, vector<1x32xf32>
      %c4 = arith.constant 4 : index
      %c0_17 = arith.constant 0 : index
      %27 = vector.load %arg4[%c4, %c0_17] : memref<8x32xf32, #tpu.memory_space<vmem>>, vector<1x1xf32>
      %cst_18 = arith.constant 0.000000e+00 : f32
      %28 = vector.broadcast %cst_18 : f32 to vector<1x32xf32>
      %29 = arith.maximumf %0, %28 : vector<1x32xf32>
      %c0_19 = arith.constant 0 : index
      %c0_20 = arith.constant 0 : index
      %30 = vector.load %arg6[%c0_19, %c0_20] : memref<1x32xf32, #tpu.memory_space<vmem>>, vector<1x32xf32>
      %cst_21 = arith.constant 1.250000e-01 : f32
      %31 = vector.broadcast %cst_21 : f32 to vector<1x32xf32>
      %32 = arith.mulf %30, %31 : vector<1x32xf32>
      %33 = arith.addf %29, %32 : vector<1x32xf32>
      %c0_22 = arith.constant 0 : index
      %c0_23 = arith.constant 0 : index
      %34 = vector.load %arg7[%c0_22, %c0_23] : memref<1x32xf32, #tpu.memory_space<vmem>>, vector<1x32xf32>
      %cst_24 = arith.constant 1.250000e-01 : f32
      %35 = vector.broadcast %cst_24 : f32 to vector<1x32xf32>
      %36 = arith.mulf %34, %35 : vector<1x32xf32>
      %37 = arith.mulf %32, %32 : vector<1x32xf32>
      %38 = arith.subf %36, %37 : vector<1x32xf32>
      %cst_25 = arith.constant 0.000000e+00 : f32
      %39 = vector.broadcast %cst_25 : f32 to vector<1x32xf32>
      %40 = arith.maximumf %38, %39 : vector<1x32xf32>
      %cst_26 = arith.constant 9.99999974E-6 : f32
      %41 = vector.broadcast %cst_26 : f32 to vector<1x32xf32>
      %42 = arith.addf %40, %41 : vector<1x32xf32>
      %43 = math.rsqrt %42 : vector<1x32xf32>
      %44 = arith.mulf %24, %43 : vector<1x32xf32>
      %45 = arith.mulf %44, %26 : vector<1x32xf32>
      %c0_27 = arith.constant 0 : index
      %c0_28 = arith.constant 0 : index
      %46 = vector.load %arg8[%c0_27, %c0_28] : memref<1x32xf32, #tpu.memory_space<vmem>>, vector<1x32xf32>
      tpu.vector_store %arg8[%c0_27, %c0_28], %45 {strides = array<i32>} : memref<1x32xf32, #tpu.memory_space<vmem>>, vector<1x32xf32>,
      %47 = arith.mulf %44, %33 : vector<1x32xf32>
      %48 = arith.subf %25, %47 : vector<1x32xf32>
      %49 = arith.mulf %48, %26 : vector<1x32xf32>
      %cst_29 = arith.constant dense<0.000000e+00> : vector<1xf32>
      %50 = vector.multi_reduction <add>, %49, %cst_29 [1] : vector<1x32xf32> to vector<1xf32>
      %51 = vector.shape_cast %50 : vector<1xf32> to vector<1x1xf32>
      %52 = arith.addf %27, %51 : vector<1x1xf32>
      %c0_30 = arith.constant 0 : index
      %c0_31 = arith.constant 0 : index
      %53 = vector.load %arg9[%c0_30, %c0_31] : memref<1x1xf32, #tpu.memory_space<vmem>>, vector<1x1xf32>
      tpu.vector_store %arg9[%c0_30, %c0_31], %52 {strides = array<i32>} : memref<1x1xf32, #tpu.memory_space<vmem>>, vector<1x1xf32>,
    } else {
    }
    %c1_i32_12 = arith.constant 1 : i32
    %21 = arith.cmpi eq, %arg0, %c1_i32_12 : i32
    %22 = arith.extui %21 : i1 to i32
    %c0_i32_13 = arith.constant 0 : i32
    %23 = arith.cmpi ne, %22, %c0_i32_13 : i32
    scf.if %23 {
      %c0_14 = arith.constant 0 : index
      %c0_15 = arith.constant 0 : index
      %24 = vector.load %arg8[%c0_14, %c0_15] : memref<1x32xf32, #tpu.memory_space<vmem>>, vector<1x32xf32>
      %25 = vector.broadcast %24 : vector<1x32xf32> to vector<16x32xf32>
      %26 = arith.mulf %7, %25 : vector<16x32xf32>
      %cst_16 = arith.constant dense<0.000000e+00> : vector<16xf32>
      %27 = vector.multi_reduction <add>, %26, %cst_16 [1] : vector<16x32xf32> to vector<16xf32>
      %28 = vector.shape_cast %27 : vector<16xf32> to vector<16x1xf32>
      %c0_17 = arith.constant 0 : index
      %c0_18 = arith.constant 0 : index
      %29 = vector.load %arg9[%c0_17, %c0_18] : memref<1x1xf32, #tpu.memory_space<vmem>>, vector<1x1xf32>
      %30 = vector.broadcast %29 : vector<1x1xf32> to vector<16x1xf32>
      %31 = arith.addf %28, %30 : vector<16x1xf32>
      %32 = arith.negf %31 : vector<16x1xf32>
      %33 = math.exp %32 : vector<16x1xf32>
      %cst_19 = arith.constant 1.000000e+00 : f32
      %34 = vector.broadcast %cst_19 : f32 to vector<16x1xf32>
      %35 = arith.addf %34, %33 : vector<16x1xf32>
      %36 = arith.divf %34, %35 : vector<16x1xf32>
      %c0_20 = arith.constant 0 : index
      %c0_21 = arith.constant 0 : index
      %37 = vector.load %arg5[%c0_20, %c0_21] : memref<16x1xf32, #tpu.memory_space<vmem>>, vector<16x1xf32>
      tpu.vector_store %arg5[%c0_20, %c0_21], %36 {strides = array<i32>} : memref<16x1xf32, #tpu.memory_space<vmem>>, vector<16x1xf32>,
    } else {
    }
    return
  }
  func.func @transform_0(%arg0: i32, %arg1: i32) -> (i32, i32) {
    %c0_i32 = arith.constant 0 : i32
    %c0_i32_0 = arith.constant 0 : i32
    return %arg1, %c0_i32 : i32, i32
  }
  func.func @transform_1(%arg0: i32, %arg1: i32) -> (i32, i32) {
    %c0_i32 = arith.constant 0 : i32
    %c0_i32_0 = arith.constant 0 : i32
    %c0_i32_1 = arith.constant 0 : i32
    return %c0_i32, %c0_i32_0 : i32, i32
  }
  func.func @transform_2(%arg0: i32, %arg1: i32) -> (i32, i32) {
    %c0_i32 = arith.constant 0 : i32
    %c0_i32_0 = arith.constant 0 : i32
    %c0_i32_1 = arith.constant 0 : i32
    return %c0_i32, %c0_i32_0 : i32, i32
  }
  func.func @transform_3(%arg0: i32, %arg1: i32) -> (i32, i32) {
    %0 = arith.muli %arg1, %arg0 : i32
    %c0_i32 = arith.constant 0 : i32
    %c0_i32_0 = arith.constant 0 : i32
    return %0, %c0_i32 : i32, i32
  }
}

</mosaic_0001>

<llo_original>
// kernel: tpu_custom_call.1
$region0: #{tpu_custom_call.1}
  #allocation0 [shape = 'u32[]', space=smem, size = 0x4, offset = 0x4, fixed_abs, tag = 'smem constant byte address 0x4 - core index']
  #allocation1 [shape = 'u32[72,128]{1,0:T(1,128)}', space=vmem, size = 0x9000, scoped, tag = 'internal scratch']
  #allocation2 [shape = 'f32[1,32]{1,0:T(1,128)}', space=vmem, size = 0x200, scoped, tag = 'scratch operand']
  #allocation3 [shape = 'f32[1,32]{1,0:T(1,128)}', space=vmem, size = 0x200, scoped, tag = 'scratch operand']
  #allocation4 [shape = 'f32[1,32]{1,0:T(1,128)}', space=vmem, size = 0x200, scoped, tag = 'scratch operand']
  #allocation5 [shape = 'f32[1,1]{1,0:T(1,128)}', space=vmem, size = 0x200, scoped, tag = 'scratch operand']
  %s0 = inlined_call_operand.hbm [shape: bf16[16,32], index: 0, kind: input, shape index: {}]
  %s1 = inlined_call_operand.hbm [shape: bf16[32,32], index: 1, kind: input, shape index: {}]
  %s2 = inlined_call_operand.hbm [shape: f32[8,32], index: 2, kind: input, shape index: {}]
  %s3 = inlined_call_operand.vmem [shape: f32[16,1], index: 3, kind: output, shape index: {}]
  %s4 = sld [smem:[#allocation0]]
  $region73: #{tpu_custom_call.1} parent=0
    _
  %s6 = ssub.s32 1, %s4
  %s7 = scalar_select 0, %s6, %s4
  $region1: #{tpu_custom_call.1} parent=0
    #allocation6 [shape = 'u8[4096]{0}', space=vmem, size = 0x1000, scoped, tag = 'input window, operand 0, single buffered']
    #allocation7 [shape = 's32[2]{0}', space=sflag, size = 0x8, scoped, tag = 'scoped memory for tpu_custom_call.1']
    #allocation8 [shape = 'u8[8192]{0}', space=vmem, size = 0x2000, scoped, tag = 'input window, operand 1, single buffered']
    #allocation9 [shape = 's32[1]{0}', space=sflag, size = 0x4, scoped, tag = 'scoped memory for tpu_custom_call.1']
    #allocation10 [shape = 'u8[4096]{0}', space=vmem, size = 0x1000, scoped, tag = 'input window, operand 2, single buffered']
    %8 = vsyncpa [#allocation7], 0
    %9 = vsyncpa [#allocation9], 0
    loop: start=0, step=1, limit=4
    $region2: #{tpu_custom_call.1} parent=1 // loop_pre_header
      _
    $region3: #{tpu_custom_call.1} parent=1 // loop_header
      %s11 = sphi 0, %s15
      %p12 = scmp.ge.s32.totalorder %s11, 4
      %s18 = sphi 0, %s30
      %s19 = sphi 0, %s26
      %s20 = sphi 0, %s18
      %s21 = sphi 0, %s19
      %s22 = sphi 0, %s20
      %s23 = sphi 0, %s21
      %s33 = sphi 0, %s35
      %s36 = sphi 0, %s33
      %s37 = sphi 0, %s36
      %s53 = sphi 0, %s37
      %s57 = sphi 0, %s57
      %s59 = sphi 0, %s57
      %s60 = sphi 0, %s59
      %s74 = sphi 0, %s60
      %s78 = sphi 0, %s78
      %s80 = sphi 0, %s78
      %s81 = sphi 0, %s80
      %s95 = sphi 0, %s81
      %s103 = sphi 0, %s105
      %s106 = sphi 0, %s103
      %s107 = sphi 0, %s106
      %s123 = sphi 0, %s107
    $region4: #{tpu_custom_call.1} parent=1 // loop_header_branch
      %14 = sbr.rel (%p12) target = $region8
    $region5: #{tpu_custom_call.1} parent=1 // loop_body
      %s16 = ssub.s32 %s11, 1
      %s17 = ssub.s32 %s11, 2
      %s24 = sadd.s32 1, %s19
      %p25 = scmp.ge.s32.totalorder %s24, 1
      %s26 = scalar_select %p25, 0, %s24
      %s27 = sadd.s32 1, %s18
      %s28 = scalar_select %p25, %s27, %s18
      %p29 = scmp.ge.s32.totalorder %s28, 2
      %s30 = scalar_select %p29, 0, %s28
      %s31 = ssub.s32 %s19, %s26
      %p32 = scmp.eq.s32.totalorder %s31, 0
      %s34 = sadd.s32 %s33, 1
      %s35 = scalar_select %p32, %s33, %s34
      %p38 = pneg %p32
      %p39 = scmp.eq.s32.totalorder %s11, 1
      %p40 = por %p38, %p39
      %p41 = scmp.ne.s32.totalorder %s33, %s36
      %p42 = scmp.eq.s32.totalorder %s11, 0
      %p43 = por %p41, %p42
      %p44 = scmp.ne.s32.totalorder %s33, %s36
      %p45 = scmp.eq.s32.totalorder %s16, 1
      %p46 = por %p44, %p45
      %p47 = scmp.ne.s32.totalorder %s36, %s37
      %p48 = scmp.eq.s32.totalorder %s16, 0
      %p49 = por %p47, %p48
      %p50 = scmp.ne.s32.totalorder %s36, %s37
      %p51 = scmp.eq.s32.totalorder %s17, 1
      %p52 = por %p50, %p51
      %p54 = scmp.ne.s32.totalorder %s37, %s53
      %p55 = scmp.eq.s32.totalorder %s17, 0
      %p56 = por %p54, %p55
      %s58 = sadd.s32 %s57, 1
      %p61 = scmp.eq.s32.totalorder %s11, 1
      %p62 = scmp.ne.s32.totalorder %s57, %s59
      %p63 = scmp.eq.s32.totalorder %s11, 0
      %p64 = por %p62, %p63
      %p65 = scmp.ne.s32.totalorder %s57, %s59
      %p66 = scmp.eq.s32.totalorder %s16, 1
      %p67 = por %p65, %p66
      %p68 = scmp.ne.s32.totalorder %s59, %s60
      %p69 = scmp.eq.s32.totalorder %s16, 0
      %p70 = por %p68, %p69
      %p71 = scmp.ne.s32.totalorder %s59, %s60
      %p72 = scmp.eq.s32.totalorder %s17, 1
      %p73 = por %p71, %p72
      %p75 = scmp.ne.s32.totalorder %s60, %s74
      %p76 = scmp.eq.s32.totalorder %s17, 0
      %p77 = por %p75, %p76
      %s79 = sadd.s32 %s78, 1
      %p82 = scmp.eq.s32.totalorder %s11, 1
      %p83 = scmp.ne.s32.totalorder %s78, %s80
      %p84 = scmp.eq.s32.totalorder %s11, 0
      %p85 = por %p83, %p84
      %p86 = scmp.ne.s32.totalorder %s78, %s80
      %p87 = scmp.eq.s32.totalorder %s16, 1
      %p88 = por %p86, %p87
      %p89 = scmp.ne.s32.totalorder %s80, %s81
      %p90 = scmp.eq.s32.totalorder %s16, 0
      %p91 = por %p89, %p90
      %p92 = scmp.ne.s32.totalorder %s80, %s81
      %p93 = scmp.eq.s32.totalorder %s17, 1
      %p94 = por %p92, %p93
      %p96 = scmp.ne.s32.totalorder %s81, %s95
      %p97 = scmp.eq.s32.totalorder %s17, 0
      %p98 = por %p96, %p97
      %s99 = smul.u32 %s19, %s18
      %s100 = smul.u32 %s26, %s30
      %s101 = ssub.s32 %s99, %s100
      %p102 = scmp.eq.s32.totalorder %s101, 0
      %s104 = sadd.s32 %s103, 1
      %s105 = scalar_select %p102, %s103, %s104
      %p108 = pneg %p102
      %p109 = scmp.eq.s32.totalorder %s11, 1
      %p110 = por %p108, %p109
      %p111 = scmp.ne.s32.totalorder %s103, %s106
      %p112 = scmp.eq.s32.totalorder %s11, 0
      %p113 = por %p111, %p112
      %p114 = scmp.ne.s32.totalorder %s103, %s106
      %p115 = scmp.eq.s32.totalorder %s16, 1
      %p116 = por %p114, %p115
      %p117 = scmp.ne.s32.totalorder %s106, %s107
      %p118 = scmp.eq.s32.totalorder %s16, 0
      %p119 = por %p117, %p118
      %p120 = scmp.ne.s32.totalorder %s106, %s107
      %p121 = scmp.eq.s32.totalorder %s17, 1
      %p122 = por %p120, %p121
      %p124 = scmp.ne.s32.totalorder %s107, %s123
      %p125 = scmp.eq.s32.totalorder %s17, 0
      %p126 = por %p124, %p125
      %p127 = scmp.le.s32.totalorder 1, %s11
      %p128 = scmp.lt.s32.totalorder %s11, 3
      %p129 = pnand %p127, %p128
      %p130 = pneg %p129
      // Predicated region
      $region9: #{tpu_custom_call.1} parent=5 // pred_check
        _
      $region10: #{tpu_custom_call.1} parent=5 // pred_check_branch
        %132 = sbr.rel (%p129) target = $region12
      $region11: #{tpu_custom_call.1} parent=5 // pred_region
        %s133 = ssub.s32 %s11, 1
        // Predicated region
        $region13: #{tpu_custom_call.1} parent=11 // pred_check
          %p134 = pneg %p49
        $region14: #{tpu_custom_call.1} parent=11 // pred_check_branch
          %136 = sbr.rel (%p134) target = $region16
        $region15: #{tpu_custom_call.1} parent=11 // pred_region
          %s137 = smul.u32 2, %s21
          %139 = vsyncadd [#allocation7], 0
          %s140 = smul.addr %s137, 4
          %s141 = scalar_lea.hbm %s0, %s140
          %s142 = sshll.u32 %s141, 4
          %s143 = int_to_ptr.hbm [resolvable:$true] %s142
          %s144 = sshll.u32 [#allocation6], 4
          %s145 = int_to_ptr.vmem [resolvable:$true] %s144
          %150 = dma.hbm_to_vmem [thread:$0]  %s143, 128, %s145, [#allocation7], 64, 64, 4
        $region16: #{tpu_custom_call.1} parent=11 // pred_fallthru
          _
        // Predicated region
        $region17: #{tpu_custom_call.1} parent=11 // pred_check
          %p151 = pneg %p70
        $region18: #{tpu_custom_call.1} parent=11 // pred_check_branch
          %153 = sbr.rel (%p151) target = $region20
        $region19: #{tpu_custom_call.1} parent=11 // pred_region
          %155 = vsyncadd [#allocation9], 0
          %s156 = sshll.u32 %s1, 4
          %s157 = int_to_ptr.hbm [resolvable:$true] %s156
          %s158 = sshll.u32 [#allocation8], 4
          %s159 = int_to_ptr.vmem [resolvable:$true] %s158
          %164 = dma.hbm_to_vmem [thread:$0]  %s157, 256, %s159, [#allocation9], 64, 64, 4
        $region20: #{tpu_custom_call.1} parent=11 // pred_fallthru
          _
        // Predicated region
        $region21: #{tpu_custom_call.1} parent=11 // pred_check
          %p165 = pneg %p91
        $region22: #{tpu_custom_call.1} parent=11 // pred_check_branch
          %167 = sbr.rel (%p165) target = $region24
        $region23: #{tpu_custom_call.1} parent=11 // pred_region
          %169 = vsyncadd [#allocation9], 0
          %s171 = sshll.u32 %s2, 4
          %s172 = int_to_ptr.hbm [resolvable:$true] %s171
          %s173 = sshll.u32 [#allocation10], 4
          %s174 = int_to_ptr.vmem [resolvable:$true] %s173
          %176 = dma.hbm_to_vmem [thread:$0]  %s172, 128, %s174, [#allocation9]
        $region24: #{tpu_custom_call.1} parent=11 // pred_fallthru
          _
      $region12: #{tpu_custom_call.1} parent=5 // pred_fallthru
        _
      %p177 = scmp.lt.s32.totalorder %s11, 2
      // Predicated region
      $region25: #{tpu_custom_call.1} parent=5 // pred_check
        %p178 = pneg %p177
      $region26: #{tpu_custom_call.1} parent=5 // pred_check_branch
        %180 = sbr.rel (%p178) target = $region28
      $region27: #{tpu_custom_call.1} parent=5 // pred_region
        _
      $region28: #{tpu_custom_call.1} parent=5 // pred_fallthru
        _
      %p181 = scmp.le.s32.totalorder 1, %s11
      %p182 = scmp.lt.s32.totalorder %s11, 3
      %p183 = pnand %p181, %p182
      %p184 = pneg %p183
      // Predicated region
      $region29: #{tpu_custom_call.1} parent=5 // pred_check
        _
      $region30: #{tpu_custom_call.1} parent=5 // pred_check_branch
        %186 = sbr.rel (%p183) target = $region32
      $region31: #{tpu_custom_call.1} parent=5 // pred_region
        %s187 = ssub.s32 %s11, 1
        // Predicated region
        $region33: #{tpu_custom_call.1} parent=31 // pred_check
          %p188 = pneg %p49
        $region34: #{tpu_custom_call.1} parent=31 // pred_check_branch
          %190 = sbr.rel (%p188) target = $region36
        $region35: #{tpu_custom_call.1} parent=31 // pred_region
          %192 = dma.done [#allocation7], 128
        $region36: #{tpu_custom_call.1} parent=31 // pred_fallthru
          _
        // Predicated region
        $region37: #{tpu_custom_call.1} parent=31 // pred_check
          %p193 = pneg %p70
        $region38: #{tpu_custom_call.1} parent=31 // pred_check_branch
          %195 = sbr.rel (%p193) target = $region40
        $region39: #{tpu_custom_call.1} parent=31 // pred_region
          %197 = dma.done [#allocation9], 256
        $region40: #{tpu_custom_call.1} parent=31 // pred_fallthru
          _
        // Predicated region
        $region41: #{tpu_custom_call.1} parent=31 // pred_check
          %p198 = pneg %p91
        $region42: #{tpu_custom_call.1} parent=31 // pred_check_branch
          %200 = sbr.rel (%p198) target = $region44
        $region43: #{tpu_custom_call.1} parent=31 // pred_region
          %202 = dma.done [#allocation9], 128
        $region44: #{tpu_custom_call.1} parent=31 // pred_fallthru
          _
        %p203 = pneg %p49
        %p204 = pneg %p46
        %p205 = pneg %p70
        %p206 = pneg %p67
        %p207 = pneg %p91
        %p208 = pneg %p88
        %p209 = pneg %p119
        %p210 = pneg %p116
        %s211 = smul.u32 %s21, %s20
        %s212 = smul.u32 2, %s211
        %p213 = scmp.lt.s32.totalorder %s212, 1
        %s214 = scalar_select %p213, %s212, 1
        %s215 = smul.addr %s214, 8
        %s216 = scalar_lea.vmem %s3, %s215
        %s217 = smul.u32 2, %s21
        %s218 = smul.u32 %s21, %s20
        %s219 = smul.u32 2, %s218
        %p220 = scmp.lt.s32.totalorder %s219, 1
        %s221 = scalar_select %p220, %s219, 1
        %s222 = smul.addr %s221, 8
        %s223 = scalar_lea.vmem %s3, %s222
        %s224 = smul.u32 %s21, %s20
        %s225 = smul.u32 2, %s224
        %v227 = vld [vmem:[#allocation10] sm:$0x1]
        %v228 = vld [vmem:[#allocation6] sm:$0xf]
        %v229 = vld [vmem:[#allocation6 + $0x4] sm:$0xf]
        %v230 = vld [vmem:[#allocation8] sm:$0xf]
        %v231 = vld [vmem:[#allocation8 + $0x4] sm:$0xf]
        %v232 = vld [vmem:[#allocation8 + $0x8] sm:$0xf]
        %v233 = vld [vmem:[#allocation8 + $0xc] sm:$0xf]
        %v234 = vperm.slane %v227, 0
        %v237 = vunpack.c.l.b16 %v228
        %v238 = vunpack.c.l.b16 %v229
        %v239 = vpack.c.b16 %v238, %v237
        %v244 = vunpack.c.l.b16 %v230
        %v245 = vunpack.c.l.b16 %v231
        %v246 = vunpack.c.l.b16 %v232
        %v247 = vunpack.c.l.b16 %v233
        %v248 = vpack.c.b16 %v245, %v244
        %v249 = vpack.c.b16 %v247, %v246
        %vm252 = vcmask 261120
        %v254 = vsel %vm252, %v239, 0
        %256 = vmatpush.bf16.msra.mxu0 0
        %257 = vmatpush.bf16.msra.mxu0 0
        %258 = vmatpush.bf16.msra.mxu0 0
        %259 = vmatpush.bf16.msra.mxu0 0
        %260 = vmatpush.bf16.msra.mxu0 0
        %261 = vmatpush.bf16.msra.mxu0 0
        %262 = vmatpush.bf16.msra.mxu0 %v249
        %263 = vmatpush.bf16.msra.mxu0 %v248
        %264 = vmatmul.bf16.gmra.mxu0 %v254
        %v265 = vpop.f32.mrf.mxu0
        %v266 = vadd.f32 %v234, %v265
        %v267 = vpop.f32.mrf.mxu0
        %v268 = vadd.f32 %v234, %v267
        %269 = vdwg.mxu0
        %v270 = vmax.f32 %v266, 0.0
        %v271 = vmax.f32 %v268, 0.0
        %p272 = scmp.eq.s32.totalorder %s20, 0
        %p273 = scmp.eq.s32.totalorder %s21, 0
        %p274 = pnand %p272, %p273
        %p275 = pneg %p274
        // Predicated region
        $region45: #{tpu_custom_call.1} parent=31 // pred_check
          _
        $region46: #{tpu_custom_call.1} parent=31 // pred_check_branch
          %277 = sbr.rel (%p274) target = $region48
        $region47: #{tpu_custom_call.1} parent=31 // pred_region
          %vm278 = vcmask 253952
          %279 = vst.msk [vmem:[#allocation2] sm:$0x1] %vm278, 0.0
          %280 = vst.msk [vmem:[#allocation3] sm:$0x1] %vm278, 0.0
        $region48: #{tpu_custom_call.1} parent=31 // pred_fallthru
          _
        // Predicated region
        $region49: #{tpu_custom_call.1} parent=31 // pred_check
          %p281 = pneg %p272
        $region50: #{tpu_custom_call.1} parent=31 // pred_check_branch
          %283 = sbr.rel (%p281) target = $region52
        $region51: #{tpu_custom_call.1} parent=31 // pred_region
          %v284 = vmax.f32 %v227, 0.0
          %v285 = vperm.slane %v284, 0
          %v286 = vsub.f32 %v270, %v285
          %v287 = vsub.f32 %v271, %v285
          %v288 = vld [vmem:[#allocation2] sm:$0x1]
          %v289 = vsel %vm252, %v286, 0.0
          %v290 = vsel %vm252, %v287, 0.0
          %v291 = vadd.f32 %v289, %v290
          %v292 = vrot.slane %v291, 4
          %v293 = vadd.f32 %v291, %v292
          %v294 = vrot.slane %v293, 2
          %v295 = vadd.f32 %v293, %v294
          %v296 = vrot.slane %v295, 1
          %v297 = vadd.f32 %v295, %v296
          %v298 = vadd.f32 %v288, %v297
          %vm299 = vcmask 253952
          %300 = vst.msk [vmem:[#allocation2] sm:$0x1] %vm299, %v298
          %v301 = vld [vmem:[#allocation3] sm:$0x1]
          %v302 = vmul.f32 %v286, %v286
          %v303 = vmul.f32 %v287, %v287
          %v304 = vsel %vm252, %v302, 0.0
          %v305 = vsel %vm252, %v303, 0.0
          %v306 = vadd.f32 %v304, %v305
          %v307 = vrot.slane %v306, 4
          %v308 = vadd.f32 %v306, %v307
          %v309 = vrot.slane %v308, 2
          %v310 = vadd.f32 %v308, %v309
          %v311 = vrot.slane %v310, 1
          %v312 = vadd.f32 %v310, %v311
          %v313 = vadd.f32 %v301, %v312
          %314 = vst.msk [vmem:[#allocation3] sm:$0x1] %vm299, %v313
        $region52: #{tpu_custom_call.1} parent=31 // pred_fallthru
          _
        %p315 = scmp.eq.s32.totalorder %s20, 1
        %p316 = pnand %p315, %p273
        %p317 = pneg %p316
        // Predicated region
        $region53: #{tpu_custom_call.1} parent=31 // pred_check
          _
        $region54: #{tpu_custom_call.1} parent=31 // pred_check_branch
          %319 = sbr.rel (%p316) target = $region56
        $region55: #{tpu_custom_call.1} parent=31 // pred_region
          %v320 = vld [vmem:[#allocation10 + $0x1] sm:$0x1]
          %v321 = vld [vmem:[#allocation10 + $0x2] sm:$0x1]
          %v322 = vld [vmem:[#allocation10 + $0x3] sm:$0x1]
          %v323 = vld [vmem:[#allocation10 + $0x4] sm:$0x1]
          %v324 = vmax.f32 %v227, 0.0
          %v325 = vld [vmem:[#allocation2] sm:$0x1]
          %v326 = vmul.f32 %v325, 0.125
          %v327 = vadd.f32 %v324, %v326
          %v328 = vld [vmem:[#allocation3] sm:$0x1]
          %v329 = vmul.f32 %v328, 0.125
          %v330 = vmul.f32 %v326, %v326
          %v331 = vsub.f32 %v329, %v330
          %v332 = vmax.f32 %v331, 0.0
          %v333 = vadd.f32 %v332, 1e-05
          %v334 = vrsqrt.pop %v333
          %v335 = vmul.f32 %v334, %v333
          %v336 = vmul.f32 %v335, %v334
          %v337 = vmul.f32 0.5, %v336
          %v338 = vsub.f32 1.5, %v337
          %v339 = vmul.f32 %v334, %v338
          %vm340 = vweird.f32 %v333
          %vm341 = vweird.f32 %v334
          %vm342 = vmor %vm340, %vm341
          %v343 = vsel %vm342, %v334, %v339
          %v344 = vmul.f32 %v320, %v343
          %v345 = vmul.f32 %v344, %v322
          %vm346 = vcmask 253952
          %347 = vst.msk [vmem:[#allocation4] sm:$0x1] %vm346, %v345
          %v348 = vmul.f32 %v344, %v327
          %v349 = vsub.f32 %v321, %v348
          %v350 = vmul.f32 %v349, %v322
          %v351 = vsel %vm346, %v350, 0.0
          %352 = vadd.xlane.f32.xlu0 %v351
          %v353 = vpop.xlane.xlu0 %352
          %v354 = vadd.f32 %v323, %v353
          %vm355 = vcmask 0
          %356 = vst.msk [vmem:[#allocation5] sm:$0x1] %vm355, %v354
        $region56: #{tpu_custom_call.1} parent=31 // pred_fallthru
          _
        // Predicated region
        $region57: #{tpu_custom_call.1} parent=31 // pred_check
          %p357 = pneg %p315
        $region58: #{tpu_custom_call.1} parent=31 // pred_check_branch
          %359 = sbr.rel (%p357) target = $region60
        $region59: #{tpu_custom_call.1} parent=31 // pred_region
          %v360 = vld [vmem:[#allocation4] sm:$0x1]
          %v362 = vperm.slane %v360, 0
          %v364 = vmul.f32 %v270, %v362
          %v365 = vmul.f32 %v271, %v362
          %v366 = vsel %vm252, %v364, 0.0
          %367 = vadd.xlane.f32.xlu0 %v366
          %v368 = vpop.xlane.xlu0 %367
          %v369 = vsel %vm252, %v365, 0.0
          %370 = vadd.xlane.f32.xlu0 %v369
          %v371 = vpop.xlane.xlu0 %370
          %v372 = vld [vmem:[#allocation5] sm:$0x1]
          %v374 = vperm.slane %v372, 0
          %v376 = vadd.f32 %v368, %v374
          %v377 = vadd.f32 %v371, %v374
          %v378 = vxor.u32 %v376, 2147483648
          %v379 = vxor.u32 %v377, 2147483648
          %v380 = vmul.f32 %v378, 1.442695
          %v381 = vpow.pop %v380
          %v382 = vmul.f32 %v379, 1.442695
          %v383 = vpow.pop %v382
          %v384 = vadd.f32 %v381, 1.0
          %v385 = vadd.f32 %v383, 1.0
          %v386 = vrcp.pop %v384
          %v387 = vmul.f32 %v384, %v386
          %v388 = vsub.f32 1.0, %v387
          %v389 = vmul.f32 %v386, %v388
          %v390 = vadd.f32 %v386, %v389
          %vm391 = vweird.f32 %v384
          %vm392 = vweird.f32 %v386
          %vm393 = vmor %vm391, %vm392
          %v394 = vsel %vm393, %v386, %v390
          %v395 = vand.u32 2147483647, %v384
          %vm396 = vcmp.eq.f32.partialorder %v395, 8.507059e+37
          %v397 = vand.u32 %v384, 2147483648
          %v398 = vor.u32 1.1754944e-38, %v397
          %v399 = vsel %vm396, %v398, %v394
          %v400 = vmul.f32 1.0, %v399
          %v401 = vrcp.pop %v385
          %v402 = vmul.f32 %v385, %v401
          %v403 = vsub.f32 1.0, %v402
          %v404 = vmul.f32 %v401, %v403
          %v405 = vadd.f32 %v401, %v404
          %vm406 = vweird.f32 %v385
          %vm407 = vweird.f32 %v401
          %vm408 = vmor %vm406, %vm407
          %v409 = vsel %vm408, %v401, %v405
          %v410 = vand.u32 2147483647, %v385
          %vm411 = vcmp.eq.f32.partialorder %v410, 8.507059e+37
          %v412 = vand.u32 %v385, 2147483648
          %v413 = vor.u32 1.1754944e-38, %v412
          %v414 = vsel %vm411, %v413, %v409
          %v415 = vmul.f32 1.0, %v414
          %vm416 = vcmask 7168
          %417 = vst.msk [vmem:[%s223] sm:$0xff] %vm416, %v400
          %418 = vst.msk [vmem:[%s223 + $0x8] sm:$0xff] %vm416, %v415
        $region60: #{tpu_custom_call.1} parent=31 // pred_fallthru
          _
        %s419 = smul.u32 %s21, %s20
        %s420 = smul.u32 2, %s419
        %p421 = scmp.lt.s32.totalorder %s420, 1
        %s422 = scalar_select %p421, %s420, 1
        %s423 = smul.addr %s422, 8
        %s424 = scalar_lea.vmem %s3, %s423
        // Predicated region
        $region61: #{tpu_custom_call.1} parent=31 // pred_check
          %p425 = pneg %p116
        $region62: #{tpu_custom_call.1} parent=31 // pred_check_branch
          %427 = sbr.rel (%p425) target = $region64
        $region63: #{tpu_custom_call.1} parent=31 // pred_region
          %s428 = smul.u32 %s21, %s20
          %s429 = smul.u32 2, %s428
        $region64: #{tpu_custom_call.1} parent=31 // pred_fallthru
          _
      $region32: #{tpu_custom_call.1} parent=5 // pred_fallthru
        _
      %p430 = scmp.le.s32.totalorder 2, %s11
      // Predicated region
      $region65: #{tpu_custom_call.1} parent=5 // pred_check
        %p431 = pneg %p430
      $region66: #{tpu_custom_call.1} parent=5 // pred_check_branch
        %433 = sbr.rel (%p431) target = $region68
      $region67: #{tpu_custom_call.1} parent=5 // pred_region
        %s434 = ssub.s32 %s11, 2
        // Predicated region
        $region69: #{tpu_custom_call.1} parent=67 // pred_check
          %p435 = pneg %p122
        $region70: #{tpu_custom_call.1} parent=67 // pred_check_branch
          %437 = sbr.rel (%p435) target = $region72
        $region71: #{tpu_custom_call.1} parent=67 // pred_region
          %s438 = smul.u32 %s23, %s22
          %s439 = smul.u32 2, %s438
          %p440 = scmp.lt.s32.totalorder %s439, 1
          %s441 = scalar_select %p440, %s439, 1
          %s442 = smul.addr %s441, 8
          %s443 = scalar_lea.vmem %s3, %s442
        $region72: #{tpu_custom_call.1} parent=67 // pred_fallthru
          _
      $region68: #{tpu_custom_call.1} parent=5 // pred_fallthru
        _
    $region6: #{tpu_custom_call.1} parent=1 // loop_footer
      %s15 = sadd.s32 1, %s11
    $region7: #{tpu_custom_call.1} parent=1 // loop_footer_branch
      %10 = sbr.rel target = $region3
    $region8: #{tpu_custom_call.1} parent=1 // loop_exit
      _
    %444 = vsyncpa [#allocation7], 1
    %s445 = scalar_lea.sflag [#allocation7], 1
    %446 = vsyncpa %s445, 1
    %447 = vsyncpa [#allocation9], 1

</llo_original>
